<compile_context>
chip_gen: v7x
topology: tpu7x:2x2x1
jax: 0.10.0
libtpu: 0.0.40
codegen_flags: <defaults>
</compile_context>

<pallas_src>
import functools

import jax
import jax.numpy as jnp
from jax.experimental import pallas as pl
from jax.experimental.pallas import tpu as pltpu

INPUT_SIZE = 32          # "input_size" ctor arg of HotelCancellationModel
H1, H2, OUT = 74, 36, 3
TB_MAX = 4096            # batch-tile cap (~7.3 MiB resident at f32; v7x-safe)


def _num_tensorcores() -> int:
    """Best-effort trace-time query of TensorCores per chip (v7x has 2)."""
    try:
        info = pltpu.get_tpu_info()
        for attr in ("num_cores", "core_count", "num_tensorcores", "tensorcore_count"):
            v = getattr(info, attr, None)
            if isinstance(v, int) and 0 < v <= 8:
                return v
    except Exception:
        pass
    try:
        kind = (getattr(jax.devices()[0], "device_kind", "") or "").lower()
        if "v7" in kind:
            return 2
    except Exception:
        pass
    return 1


def _pick_batch_tile(B: int, num_cores: int) -> int:
    """Rows per grid step.

    * 1-TC parts (v5e/v6e) or tiny batches: a single full-batch block up to
      TB_MAX — a second grid step is ~0.35us of pure serial overhead there.
    * 2-TC parts (v7x, batch axis marked "parallel"): smallest even step count
      2k whose tile fits TB_MAX; TB rounded up to a multiple of 8 (the only
      hard sublane constraint, since the output layout is now [B, 3]) so the
      two TensorCores get a near-balanced load.
    """
    if num_cores <= 1 or B <= 256:
        return B if B <= TB_MAX else TB_MAX
    k = 1
    while True:
        tb = -(-B // (2 * k))            # cdiv(B, 2k)
        tb = ((tb + 7) // 8) * 8         # second-to-last dim must be /8 (or == B)
        if tb <= TB_MAX:
            return tb
        k += 1


def _mlp_kernel(x_ref, w1_ref, b1_ref, w2_ref, b2_ref, w3_ref, b3_ref, o_ref):
    # INVARIANT: every op here is row-independent (no batch-wise reductions or
    # normalization). That is what makes the ragged last grid block safe: the
    # out-of-range rows compute on uninitialized VMEM and their stores are
    # clamped by Pallas. Do not add cross-row ops without revisiting tiling.
    x = x_ref[...]
    h1 = jnp.dot(x, w1_ref[...], preferred_element_type=jnp.float32)
    h1 = jnp.maximum(h1 + b1_ref[...], 0.0)                 # Linear(32,74)+ReLU (f32)
    h2 = jnp.dot(h1.astype(w2_ref.dtype), w2_ref[...],
                 preferred_element_type=jnp.float32)
    h2 = jnp.maximum(h2 + b2_ref[...], 0.0)                 # Linear(74,36)+ReLU (f32)
    out = jnp.dot(h2.astype(w3_ref.dtype), w3_ref[...],
                  preferred_element_type=jnp.float32)
    o_ref[...] = (out + b3_ref[...]).astype(o_ref.dtype)    # Linear(36,3), [TB, 3]


@functools.partial(jax.jit, static_argnames=("use_bf16",))
def hotel_cancellation_forward(x, w1, b1, w2, b2, w3, b3, use_bf16=False):
    """x: [B, input_size] -> [B, 3] float32."""
    B, D = x.shape
    if use_bf16:
        # Opt-in: halves the dominant x HBM read and uses the bf16 MXU path.
        # Accumulation stays f32 (preferred_element_type); bias/ReLU stay f32.
        x = x.astype(jnp.bfloat16)
        w1, w2, w3 = (w.astype(jnp.bfloat16) for w in (w1, w2, w3))

    TB = _pick_batch_tile(B, _num_tensorcores())
    grid = (pl.cdiv(B, TB),)   # ragged last block handled by Pallas; no jnp.pad

    # Resident parameters: constant block index -> DMA'd once, not per step.
    full = lambda shape: pl.BlockSpec(shape, lambda i: (0, 0))

    out = pl.pallas_call(
        _mlp_kernel,
        out_shape=jax.ShapeDtypeStruct((B, OUT), jnp.float32),
        grid_spec=pltpu.PrefetchScalarGridSpec(
            num_scalar_prefetch=0,
            grid=grid,
            in_specs=[
                pl.BlockSpec((TB, D), lambda i: (i, 0)),   # x tile
                full((D, H1)),   full((1, H1)),            # layer 1 (resident)
                full((H1, H2)),  full((1, H2)),            # layer 2
                full((H2, OUT)), full((1, OUT)),           # layer 3
            ],
            out_specs=pl.BlockSpec((TB, OUT), lambda i: (i, 0)),  # [B, 3] directly
        ),
        compiler_params=pltpu.CompilerParams(
            dimension_semantics=("parallel",),   # shard batch tiles across TCs (v7x)
            vmem_limit_bytes=32 * 1024 * 1024,   # explicit, v7x-safe budget
        ),
    )(x, w1, b1, w2, b2, w3, b3)

    return out


def init_params(key, input_size=INPUT_SIZE):
    """Deterministic init mirroring nn.Linear's uniform(-1/sqrt(fan_in), ...)."""
    ks = jax.random.split(key, 6)

    def lin(kw, kb, fan_in, fan_out):
        bound = 1.0 / jnp.sqrt(fan_in)
        # stored as [in, out] (transpose of PyTorch's [out, in])
        w = jax.random.uniform(kw, (fan_in, fan_out), jnp.float32, -bound, bound)
        b = jax.random.uniform(kb, (1, fan_out), jnp.float32, -bound, bound)
        return w, b

    w1, b1 = lin(ks[0], ks[1], input_size, H1)
    w2, b2 = lin(ks[2], ks[3], H1, H2)
    w3, b3 = lin(ks[4], ks[5], H2, OUT)
    return w1, b1, w2, b2, w3, b3


def reference_forward(x, w1, b1, w2, b2, w3, b3):
    h1 = jnp.maximum(x @ w1 + b1, 0.0)
    h2 = jnp.maximum(h1 @ w2 + b2, 0.0)
    return h2 @ w3 + b3


if __name__ == "__main__":
    key = jax.random.PRNGKey(0)
    kx, kp, kx2 = jax.random.split(key, 3)
    params = init_params(kp)

    # Primary small-shape run (f32 path, single block).
    batch = 8
    x = jax.random.normal(kx, (batch, INPUT_SIZE), jnp.float32)
    y = jax.block_until_ready(hotel_cancellation_forward(x, *params))
    y_ref = reference_forward(x, *params)
    assert y.shape == (batch, OUT)
    assert jnp.allclose(y, y_ref, atol=1e-4, rtol=1e-4)

    # Multi-step grid with a ragged last block (no wrapper pad / transpose).
    batch2 = 4100
    x2 = jax.random.normal(kx2, (batch2, INPUT_SIZE), jnp.float32)
    y2 = jax.block_until_ready(hotel_cancellation_forward(x2, *params))
    y2_ref = reference_forward(x2, *params)
    assert y2.shape == (batch2, OUT)
    assert jnp.allclose(y2, y2_ref, atol=1e-4, rtol=1e-4)

    # Opt-in bf16 input/weight path (memory-bound roofline win); relaxed tol.
    y3 = jax.block_until_ready(hotel_cancellation_forward(x, *params, use_bf16=True))
    assert y3.shape == (batch, OUT)
    assert jnp.allclose(y3, y_ref, atol=1e-1, rtol=1e-1)

    print("KERNEL_OK")
</pallas_src>

<mosaic_0001>
module attributes {stable_mosaic.version = 11 : i64} {
  func.func @_mlp_kernel(%arg0: i32, %arg1: memref<8x32xf32, #tpu.memory_space<vmem>>, %arg2: memref<32x74xf32, #tpu.memory_space<vmem>>, %arg3: memref<1x74xf32, #tpu.memory_space<vmem>>, %arg4: memref<74x36xf32, #tpu.memory_space<vmem>>, %arg5: memref<1x36xf32, #tpu.memory_space<vmem>>, %arg6: memref<36x3xf32, #tpu.memory_space<vmem>>, %arg7: memref<1x3xf32, #tpu.memory_space<vmem>>, %arg8: memref<8x3xf32, #tpu.memory_space<vmem>>) attributes {dimension_semantics = [#tpu.dimension_semantics<parallel>], iteration_bounds = array<i64: 1>, scalar_prefetch = 0 : i64, scratch_operands = 0 : i64, tpu.core_type = #tpu.core_type<tc>, window_params = [{transform_indices = @transform_0, window_bounds = array<i64: 8, 32>}, {pipeline_mode = #tpu.pipeline_mode<synchronous>, transform_indices = @transform_1, window_bounds = array<i64: 32, 74>}, {pipeline_mode = #tpu.pipeline_mode<synchronous>, transform_indices = @transform_2, window_bounds = array<i64: 1, 74>}, {pipeline_mode = #tpu.pipeline_mode<synchronous>, transform_indices = @transform_3, window_bounds = array<i64: 74, 36>}, {pipeline_mode = #tpu.pipeline_mode<synchronous>, transform_indices = @transform_4, window_bounds = array<i64: 1, 36>}, {pipeline_mode = #tpu.pipeline_mode<synchronous>, transform_indices = @transform_5, window_bounds = array<i64: 36, 3>}, {pipeline_mode = #tpu.pipeline_mode<synchronous>, transform_indices = @transform_6, window_bounds = array<i64: 1, 3>}, {transform_indices = @transform_7, window_bounds = array<i64: 8, 3>}]} {
    %c0 = arith.constant 0 : index
    %c0_0 = arith.constant 0 : index
    %0 = vector.load %arg1[%c0, %c0_0] : memref<8x32xf32, #tpu.memory_space<vmem>>, vector<8x32xf32>
    %c0_1 = arith.constant 0 : index
    %c0_2 = arith.constant 0 : index
    %1 = vector.load %arg2[%c0_1, %c0_2] : memref<32x74xf32, #tpu.memory_space<vmem>>, vector<32x74xf32>
    %cst = arith.constant dense<0.000000e+00> : vector<8x74xf32>
    %2 = tpu.matmul %0, %1, %cst {dimension_numbers = #tpu.dot_dimension_numbers<[1], [0], [0], [1], [0, 0, 1, 1], [], []>} : vector<8x32xf32>, vector<32x74xf32>, vector<8x74xf32> -> vector<8x74xf32>
    %c0_3 = arith.constant 0 : index
    %c0_4 = arith.constant 0 : index
    %3 = vector.load %arg3[%c0_3, %c0_4] : memref<1x74xf32, #tpu.memory_space<vmem>>, vector<1x74xf32>
    %4 = vector.broadcast %3 : vector<1x74xf32> to vector<8x74xf32>
    %5 = arith.addf %2, %4 : vector<8x74xf32>
    %cst_5 = arith.constant 0.000000e+00 : f32
    %6 = vector.broadcast %cst_5 : f32 to vector<8x74xf32>
    %7 = arith.maximumf %5, %6 : vector<8x74xf32>
    %c0_6 = arith.constant 0 : index
    %c0_7 = arith.constant 0 : index
    %8 = vector.load %arg4[%c0_6, %c0_7] : memref<74x36xf32, #tpu.memory_space<vmem>>, vector<74x36xf32>
    %cst_8 = arith.constant dense<0.000000e+00> : vector<8x36xf32>
    %9 = tpu.matmul %7, %8, %cst_8 {dimension_numbers = #tpu.dot_dimension_numbers<[1], [0], [0], [1], [0, 0, 1, 1], [], []>} : vector<8x74xf32>, vector<74x36xf32>, vector<8x36xf32> -> vector<8x36xf32>
    %c0_9 = arith.constant 0 : index
    %c0_10 = arith.constant 0 : index
    %10 = vector.load %arg5[%c0_9, %c0_10] : memref<1x36xf32, #tpu.memory_space<vmem>>, vector<1x36xf32>
    %11 = vector.broadcast %10 : vector<1x36xf32> to vector<8x36xf32>
    %12 = arith.addf %9, %11 : vector<8x36xf32>
    %cst_11 = arith.constant 0.000000e+00 : f32
    %13 = vector.broadcast %cst_11 : f32 to vector<8x36xf32>
    %14 = arith.maximumf %12, %13 : vector<8x36xf32>
    %c0_12 = arith.constant 0 : index
    %c0_13 = arith.constant 0 : index
    %15 = vector.load %arg6[%c0_12, %c0_13] : memref<36x3xf32, #tpu.memory_space<vmem>>, vector<36x3xf32>
    %cst_14 = arith.constant dense<0.000000e+00> : vector<8x3xf32>
    %16 = tpu.matmul %14, %15, %cst_14 {dimension_numbers = #tpu.dot_dimension_numbers<[1], [0], [0], [1], [0, 0, 1, 1], [], []>} : vector<8x36xf32>, vector<36x3xf32>, vector<8x3xf32> -> vector<8x3xf32>
    %c0_15 = arith.constant 0 : index
    %c0_16 = arith.constant 0 : index
    %17 = vector.load %arg7[%c0_15, %c0_16] : memref<1x3xf32, #tpu.memory_space<vmem>>, vector<1x3xf32>
    %18 = vector.broadcast %17 : vector<1x3xf32> to vector<8x3xf32>
    %19 = arith.addf %16, %18 : vector<8x3xf32>
    %c0_17 = arith.constant 0 : index
    %c0_18 = arith.constant 0 : index
    %20 = vector.load %arg8[%c0_17, %c0_18] : memref<8x3xf32, #tpu.memory_space<vmem>>, vector<8x3xf32>
    tpu.vector_store %arg8[%c0_17, %c0_18], %19 {strides = array<i32>} : memref<8x3xf32, #tpu.memory_space<vmem>>, vector<8x3xf32>,
    return
  }
  func.func @transform_0(%arg0: i32) -> (i32, i32) {
    %c0_i32 = arith.constant 0 : i32
    %c0_i32_0 = arith.constant 0 : i32
    return %arg0, %c0_i32 : i32, i32
  }
  func.func @transform_1(%arg0: i32) -> (i32, i32) {
    %c0_i32 = arith.constant 0 : i32
    %c0_i32_0 = arith.constant 0 : i32
    %c0_i32_1 = arith.constant 0 : i32
    return %c0_i32, %c0_i32_0 : i32, i32
  }
  func.func @transform_2(%arg0: i32) -> (i32, i32) {
    %c0_i32 = arith.constant 0 : i32
    %c0_i32_0 = arith.constant 0 : i32
    %c0_i32_1 = arith.constant 0 : i32
    return %c0_i32, %c0_i32_0 : i32, i32
  }
  func.func @transform_3(%arg0: i32) -> (i32, i32) {
    %c0_i32 = arith.constant 0 : i32
    %c0_i32_0 = arith.constant 0 : i32
    %c0_i32_1 = arith.constant 0 : i32
    return %c0_i32, %c0_i32_0 : i32, i32
  }
  func.func @transform_4(%arg0: i32) -> (i32, i32) {
    %c0_i32 = arith.constant 0 : i32
    %c0_i32_0 = arith.constant 0 : i32
    %c0_i32_1 = arith.constant 0 : i32
    return %c0_i32, %c0_i32_0 : i32, i32
  }
  func.func @transform_5(%arg0: i32) -> (i32, i32) {
    %c0_i32 = arith.constant 0 : i32
    %c0_i32_0 = arith.constant 0 : i32
    %c0_i32_1 = arith.constant 0 : i32
    return %c0_i32, %c0_i32_0 : i32, i32
  }
  func.func @transform_6(%arg0: i32) -> (i32, i32) {
    %c0_i32 = arith.constant 0 : i32
    %c0_i32_0 = arith.constant 0 : i32
    %c0_i32_1 = arith.constant 0 : i32
    return %c0_i32, %c0_i32_0 : i32, i32
  }
  func.func @transform_7(%arg0: i32) -> (i32, i32) {
    %c0_i32 = arith.constant 0 : i32
    %c0_i32_0 = arith.constant 0 : i32
    return %arg0, %c0_i32 : i32, i32
  }
}

</mosaic_0001>

<llo_original>
// kernel: hotel_cancellation_forward.1
$region0: #{hotel_cancellation_forward.1}
  #allocation0 [shape = 'u32[]', space=smem, size = 0x4, offset = 0x4, fixed_abs, tag = 'smem constant byte address 0x4 - core index']
  #allocation1 [shape = 'u32[144,128]{1,0:T(1,128)}', space=vmem, size = 0x12000, scoped, tag = 'internal scratch']
  %s0 = inlined_call_operand.vmem [shape: f32[8,32], index: 0, kind: input, shape index: {}]
  %s1 = inlined_call_operand.vmem [shape: f32[32,74], index: 1, kind: input, shape index: {}]
  %s2 = inlined_call_operand.vmem [shape: f32[1,74], index: 2, kind: input, shape index: {}]
  %s3 = inlined_call_operand.vmem [shape: f32[74,36], index: 3, kind: input, shape index: {}]
  %s4 = inlined_call_operand.vmem [shape: f32[1,36], index: 4, kind: input, shape index: {}]
  %s5 = inlined_call_operand.vmem [shape: f32[36,3], index: 5, kind: input, shape index: {}]
  %s6 = inlined_call_operand.vmem [shape: f32[1,3], index: 6, kind: input, shape index: {}]
  %s7 = inlined_call_operand.vmem [shape: f32[8,3], index: 7, kind: output, shape index: {}]
  %s8 = sld [smem:[#allocation0]]
  $region38: #{hotel_cancellation_forward.1} parent=0
    _
  %s10 = ssub.s32 1, %s8
  %s11 = scalar_select 0, %s10, %s8
  // Predicated region
  $region2: #{hotel_cancellation_forward.1} parent=0 // pred_check
    _
  $region3: #{hotel_cancellation_forward.1} parent=0 // pred_check_branch
    %13 = sbr.rel (0) target = $region5
  $region4: #{hotel_cancellation_forward.1} parent=0 // pred_region
    _
  $region5: #{hotel_cancellation_forward.1} parent=0 // pred_fallthru
    _
  // Predicated region
  $region6: #{hotel_cancellation_forward.1} parent=0 // pred_check
    _
  $region7: #{hotel_cancellation_forward.1} parent=0 // pred_check_branch
    %15 = sbr.rel (0) target = $region9
  $region8: #{hotel_cancellation_forward.1} parent=0 // pred_region
    _
  $region9: #{hotel_cancellation_forward.1} parent=0 // pred_fallthru
    _
  // Predicated region
  $region10: #{hotel_cancellation_forward.1} parent=0 // pred_check
    _
  $region11: #{hotel_cancellation_forward.1} parent=0 // pred_check_branch
    %17 = sbr.rel (0) target = $region13
  $region12: #{hotel_cancellation_forward.1} parent=0 // pred_region
    _
  $region13: #{hotel_cancellation_forward.1} parent=0 // pred_fallthru
    _
  // Predicated region
  $region14: #{hotel_cancellation_forward.1} parent=0 // pred_check
    _
  $region15: #{hotel_cancellation_forward.1} parent=0 // pred_check_branch
    %19 = sbr.rel (0) target = $region17
  $region16: #{hotel_cancellation_forward.1} parent=0 // pred_region
    _
  $region17: #{hotel_cancellation_forward.1} parent=0 // pred_fallthru
    _
  // Predicated region
  $region18: #{hotel_cancellation_forward.1} parent=0 // pred_check
    _
  $region19: #{hotel_cancellation_forward.1} parent=0 // pred_check_branch
    %21 = sbr.rel (0) target = $region21
  $region20: #{hotel_cancellation_forward.1} parent=0 // pred_region
    _
  $region21: #{hotel_cancellation_forward.1} parent=0 // pred_fallthru
    _
  // Predicated region
  $region22: #{hotel_cancellation_forward.1} parent=0 // pred_check
    _
  $region23: #{hotel_cancellation_forward.1} parent=0 // pred_check_branch
    %23 = sbr.rel (0) target = $region25
  $region24: #{hotel_cancellation_forward.1} parent=0 // pred_region
    _
  $region25: #{hotel_cancellation_forward.1} parent=0 // pred_fallthru
    _
  // Predicated region
  $region26: #{hotel_cancellation_forward.1} parent=0 // pred_check
    _
  $region27: #{hotel_cancellation_forward.1} parent=0 // pred_check_branch
    %25 = sbr.rel (0) target = $region29
  $region28: #{hotel_cancellation_forward.1} parent=0 // pred_region
    _
  $region29: #{hotel_cancellation_forward.1} parent=0 // pred_fallthru
    _
  %v26 = vld [vmem:[%s0] sm:$0xff]
  %v27 = vld [vmem:[%s1] sm:$0xff]
  %v28 = vld [vmem:[%s1 + $0x8] sm:$0xff]
  %v29 = vld [vmem:[%s1 + $0x10] sm:$0xff]
  %v30 = vld [vmem:[%s1 + $0x18] sm:$0xff]
  %v31 = vld [vmem:[%s2] sm:$0x1]
  %v33 = vlaneseq
  %v34 = vshrl.u32 %v33, 7
  %v35 = vsub.s32 0, %v34
  %v36 = vrot.slane %v31, %v35
  %vm38 = vcmask 261120
  %v40 = vsel %vm38, %v26, 0
  %42 = vmatprep.subr.mxu0 0.0
  %43 = vmatpush1.msra.mxu0 %v27
  %44 = vmatprep.subr.mxu0 0.0
  %45 = vmatpush1.msra.mxu0 %v28
  %46 = vmatprep.subr.mxu0 0.0
  %47 = vmatpush1.msra.mxu0 %v29
  %48 = vmatprep.subr.mxu0 0.0
  %49 = vmatpush1.msra.mxu0 %v30
  %50 = vmatprep.subr.mxu0 0.0
  %51 = vmatpush1.msra.mxu0 0.0
  %52 = vmatprep.subr.mxu0 0.0
  %53 = vmatpush1.msra.mxu0 0.0
  %54 = vmatprep.subr.mxu0 0.0
  %55 = vmatpush1.msra.mxu0 0.0
  %56 = vmatprep.subr.mxu0 0.0
  %57 = vmatpush1.msra.mxu0 0.0
  %58 = vmatprep.subr.mxu0 0.0
  %59 = vmatpush1.msra.mxu0 0.0
  %60 = vmatprep.subr.mxu0 0.0
  %61 = vmatpush1.msra.mxu0 0.0
  %62 = vmatprep.subr.mxu0 0.0
  %63 = vmatpush1.msra.mxu0 0.0
  %64 = vmatprep.subr.mxu0 0.0
  %65 = vmatpush1.msra.mxu0 0.0
  %66 = vmatprep.subr.mxu0 0.0
  %67 = vmatpush1.msra.mxu0 0.0
  %68 = vmatprep.subr.mxu0 0.0
  %69 = vmatpush1.msra.mxu0 0.0
  %70 = vmatprep.subr.mxu0 0.0
  %71 = vmatpush1.msra.mxu0 0.0
  %72 = vmatprep.subr.mxu0 0.0
  %73 = vmatpush1.msra.mxu0 0.0
  %74 = vmatprep.subr.mxu0 0.0
  %75 = vmatpush1.msra.mxu0 0.0
  %76 = vmatprep.subr.mxu0 0.0
  %77 = vmatpush1.msra.mxu0 0.0
  %78 = vmatprep.subr.mxu0 0.0
  %79 = vmatpush1.msra.mxu0 0.0
  %80 = vmatprep.subr.mxu0 0.0
  %81 = vmatpush1.msra.mxu0 0.0
  %82 = vmatprep.subr.mxu0 0.0
  %83 = vmatpush1.msra.mxu0 0.0
  %84 = vmatprep.subr.mxu0 0.0
  %85 = vmatpush1.msra.mxu0 0.0
  %86 = vmatprep.subr.mxu0 0.0
  %87 = vmatpush1.msra.mxu0 0.0
  %88 = vmatprep.subr.mxu0 0.0
  %89 = vmatpush1.msra.mxu0 0.0
  %90 = vmatprep.subr.mxu0 0.0
  %91 = vmatpush1.msra.mxu0 0.0
  %92 = vmatprep.subr.mxu0 0.0
  %93 = vmatpush1.msra.mxu0 0.0
  %94 = vmatprep.subr.mxu0 0.0
  %95 = vmatpush1.msra.mxu0 0.0
  %96 = vmatprep.subr.mxu0 0.0
  %97 = vmatpush1.msra.mxu0 0.0
  %98 = vmatprep.subr.mxu0 0.0
  %99 = vmatpush1.msra.mxu0 0.0
  %100 = vmatprep.subr.mxu0 0.0
  %101 = vmatpush1.msra.mxu0 0.0
  %102 = vmatprep.subr.mxu0 0.0
  %103 = vmatpush1.msra.mxu0 0.0
  %104 = vmatprep.subr.mxu0 0.0
  %105 = vmatpush1.msra.mxu0 0.0
  %106 = vmatprep.mubr.f32.mxu0 0.0
  %107 = vmatmul.mubr.f32.gmra.mrb[0].mxu0 %v40
  %v108 = vpop.f32.mrb[0].mxu0
  %v109 = vadd.f32 %v36, %v108
  %v110 = vpop.f32.mrb[0].mxu0
  %111 = vdwg.mxu0
  %v112 = vmax.f32 %v109, 0.0
  %v113 = vld [vmem:[%s3] sm:$0xff]
  %v114 = vld [vmem:[%s3 + $0x8] sm:$0xff]
  %v115 = vld [vmem:[%s3 + $0x10] sm:$0xff]
  %v116 = vld [vmem:[%s3 + $0x18] sm:$0xff]
  %v117 = vld [vmem:[%s3 + $0x20] sm:$0xff]
  %v118 = vld [vmem:[%s3 + $0x28] sm:$0xff]
  %v119 = vld [vmem:[%s3 + $0x30] sm:$0xff]
  %v120 = vld [vmem:[%s3 + $0x38] sm:$0xff]
  %v121 = vld [vmem:[%s3 + $0x40] sm:$0xff]
  %v122 = vld [vmem:[%s3 + $0x48] sm:$0x3]
  %v123 = vld [vmem:[%s4] sm:$0x1]
  %v125 = vlaneseq
  %v126 = vshrl.u32 %v125, 7
  %v127 = vsub.s32 0, %v126
  %v128 = vrot.slane %v123, %v127
  %vm130 = vcmask 605184
  %v132 = vsel %vm130, %v112, 0
  %vm134 = vcmask 1041408
  %v136 = vsel %vm134, %v122, 0
  %138 = vmatprep.subr.mxu0 0.0
  %139 = vmatpush1.msra.mxu0 %v113
  %140 = vmatprep.subr.mxu0 0.0
  %141 = vmatpush1.msra.mxu0 %v114
  %142 = vmatprep.subr.mxu0 0.0
  %143 = vmatpush1.msra.mxu0 %v115
  %144 = vmatprep.subr.mxu0 0.0
  %145 = vmatpush1.msra.mxu0 %v116
  %146 = vmatprep.subr.mxu0 0.0
  %147 = vmatpush1.msra.mxu0 %v117
  %148 = vmatprep.subr.mxu0 0.0
  %149 = vmatpush1.msra.mxu0 %v118
  %150 = vmatprep.subr.mxu0 0.0
  %151 = vmatpush1.msra.mxu0 %v119
  %152 = vmatprep.subr.mxu0 0.0
  %153 = vmatpush1.msra.mxu0 %v120
  %154 = vmatprep.subr.mxu0 0.0
  %155 = vmatpush1.msra.mxu0 %v121
  %156 = vmatprep.subr.mxu0 0.0
  %157 = vmatpush1.msra.mxu0 %v136
  %158 = vmatprep.subr.mxu0 0.0
  %159 = vmatpush1.msra.mxu0 0.0
  %160 = vmatprep.subr.mxu0 0.0
  %161 = vmatpush1.msra.mxu0 0.0
  %162 = vmatprep.subr.mxu0 0.0
  %163 = vmatpush1.msra.mxu0 0.0
  %164 = vmatprep.subr.mxu0 0.0
  %165 = vmatpush1.msra.mxu0 0.0
  %166 = vmatprep.subr.mxu0 0.0
  %167 = vmatpush1.msra.mxu0 0.0
  %168 = vmatprep.subr.mxu0 0.0
  %169 = vmatpush1.msra.mxu0 0.0
  %170 = vmatprep.subr.mxu0 0.0
  %171 = vmatpush1.msra.mxu0 0.0
  %172 = vmatprep.subr.mxu0 0.0
  %173 = vmatpush1.msra.mxu0 0.0
  %174 = vmatprep.subr.mxu0 0.0
  %175 = vmatpush1.msra.mxu0 0.0
  %176 = vmatprep.subr.mxu0 0.0
  %177 = vmatpush1.msra.mxu0 0.0
  %178 = vmatprep.subr.mxu0 0.0
  %179 = vmatpush1.msra.mxu0 0.0
  %180 = vmatprep.subr.mxu0 0.0
  %181 = vmatpush1.msra.mxu0 0.0
  %182 = vmatprep.subr.mxu0 0.0
  %183 = vmatpush1.msra.mxu0 0.0
  %184 = vmatprep.subr.mxu0 0.0
  %185 = vmatpush1.msra.mxu0 0.0
  %186 = vmatprep.subr.mxu0 0.0
  %187 = vmatpush1.msra.mxu0 0.0
  %188 = vmatprep.subr.mxu0 0.0
  %189 = vmatpush1.msra.mxu0 0.0
  %190 = vmatprep.subr.mxu0 0.0
  %191 = vmatpush1.msra.mxu0 0.0
  %192 = vmatprep.subr.mxu0 0.0
  %193 = vmatpush1.msra.mxu0 0.0
  %194 = vmatprep.subr.mxu0 0.0
  %195 = vmatpush1.msra.mxu0 0.0
  %196 = vmatprep.subr.mxu0 0.0
  %197 = vmatpush1.msra.mxu0 0.0
  %198 = vmatprep.subr.mxu0 0.0
  %199 = vmatpush1.msra.mxu0 0.0
  %200 = vmatprep.subr.mxu0 0.0
  %201 = vmatpush1.msra.mxu0 0.0
  %202 = vmatprep.mubr.f32.mxu0 0.0
  %203 = vmatmul.mubr.f32.gmra.mrb[0].mxu0 %v132
  %v204 = vpop.f32.mrb[0].mxu0
  %v205 = vadd.f32 %v128, %v204
  %v206 = vpop.f32.mrb[0].mxu0
  %207 = vdwg.mxu0
  %v208 = vmax.f32 %v205, 0.0
  %v209 = vld [vmem:[%s5] sm:$0xff]
  %v210 = vld [vmem:[%s5 + $0x8] sm:$0xff]
  %v211 = vld [vmem:[%s5 + $0x10] sm:$0xff]
  %v212 = vld [vmem:[%s5 + $0x18] sm:$0xff]
  %v213 = vld [vmem:[%s5 + $0x20] sm:$0xf]
  %v214 = vld [vmem:[%s6] sm:$0x1]
  %v216 = vlaneseq
  %v217 = vshrl.u32 %v216, 7
  %v218 = vsub.s32 0, %v217
  %v219 = vrot.slane %v214, %v218
  %vm221 = vcmask 293888
  %v223 = vsel %vm221, %v208, 0
  %vm225 = vcmask 1043456
  %v227 = vsel %vm225, %v213, 0
  %229 = vmatprep.subr.mxu0 0.0
  %230 = vmatpush1.msra.mxu0 %v209
  %231 = vmatprep.subr.mxu0 0.0
  %232 = vmatpush1.msra.mxu0 %v210
  %233 = vmatprep.subr.mxu0 0.0
  %234 = vmatpush1.msra.mxu0 %v211
  %235 = vmatprep.subr.mxu0 0.0
  %236 = vmatpush1.msra.mxu0 %v212
  %237 = vmatprep.subr.mxu0 0.0
  %238 = vmatpush1.msra.mxu0 %v227
  %239 = vmatprep.subr.mxu0 0.0
  %240 = vmatpush1.msra.mxu0 0.0
  %241 = vmatprep.subr.mxu0 0.0
  %242 = vmatpush1.msra.mxu0 0.0
  %243 = vmatprep.subr.mxu0 0.0
  %244 = vmatpush1.msra.mxu0 0.0
  %245 = vmatprep.subr.mxu0 0.0
  %246 = vmatpush1.msra.mxu0 0.0
  %247 = vmatprep.subr.mxu0 0.0
  %248 = vmatpush1.msra.mxu0 0.0
  %249 = vmatprep.subr.mxu0 0.0
  %250 = vmatpush1.msra.mxu0 0.0
  %251 = vmatprep.subr.mxu0 0.0
  %252 = vmatpush1.msra.mxu0 0.0
  %253 = vmatprep.subr.mxu0 0.0
  %254 = vmatpush1.msra.mxu0 0.0
  %255 = vmatprep.subr.mxu0 0.0
  %256 = vmatpush1.msra.mxu0 0.0
  %257 = vmatprep.subr.mxu0 0.0
  %258 = vmatpush1.msra.mxu0 0.0
  %259 = vmatprep.subr.mxu0 0.0
  %260 = vmatpush1.msra.mxu0 0.0
  %261 = vmatprep.subr.mxu0 0.0
  %262 = vmatpush1.msra.mxu0 0.0
  %263 = vmatprep.subr.mxu0 0.0
  %264 = vmatpush1.msra.mxu0 0.0
  %265 = vmatprep.subr.mxu0 0.0
  %266 = vmatpush1.msra.mxu0 0.0
  %267 = vmatprep.subr.mxu0 0.0
  %268 = vmatpush1.msra.mxu0 0.0
  %269 = vmatprep.subr.mxu0 0.0
  %270 = vmatpush1.msra.mxu0 0.0
  %271 = vmatprep.subr.mxu0 0.0
  %272 = vmatpush1.msra.mxu0 0.0
  %273 = vmatprep.subr.mxu0 0.0
  %274 = vmatpush1.msra.mxu0 0.0
  %275 = vmatprep.subr.mxu0 0.0
  %276 = vmatpush1.msra.mxu0 0.0
  %277 = vmatprep.subr.mxu0 0.0
  %278 = vmatpush1.msra.mxu0 0.0
  %279 = vmatprep.subr.mxu0 0.0
  %280 = vmatpush1.msra.mxu0 0.0
  %281 = vmatprep.subr.mxu0 0.0
  %282 = vmatpush1.msra.mxu0 0.0
  %283 = vmatprep.subr.mxu0 0.0
  %284 = vmatpush1.msra.mxu0 0.0
  %285 = vmatprep.subr.mxu0 0.0
  %286 = vmatpush1.msra.mxu0 0.0
  %287 = vmatprep.subr.mxu0 0.0
  %288 = vmatpush1.msra.mxu0 0.0
  %289 = vmatprep.subr.mxu0 0.0
  %290 = vmatpush1.msra.mxu0 0.0
  %291 = vmatprep.subr.mxu0 0.0
  %292 = vmatpush1.msra.mxu0 0.0
  %293 = vmatprep.mubr.f32.mxu0 0.0
  %294 = vmatmul.mubr.f32.gmra.mrb[0].mxu0 %v223
  %v295 = vpop.f32.mrb[0].mxu0
  %v296 = vadd.f32 %v219, %v295
  %v297 = vpop.f32.mrb[0].mxu0
  %298 = vdwg.mxu0
  %vm299 = vcmask 23552
  %300 = vst.msk [vmem:[%s7] sm:$0xff] %vm299, %v296
  // Predicated region
  $region30: #{hotel_cancellation_forward.1} parent=0 // pred_check
    _
  $region31: #{hotel_cancellation_forward.1} parent=0 // pred_check_branch
    %302 = sbr.rel (0) target = $region33
  $region32: #{hotel_cancellation_forward.1} parent=0 // pred_region
    _
  $region33: #{hotel_cancellation_forward.1} parent=0 // pred_fallthru
    _
  // Predicated region
  $region34: #{hotel_cancellation_forward.1} parent=0 // pred_check
    _
  $region35: #{hotel_cancellation_forward.1} parent=0 // pred_check_branch
    %304 = sbr.rel (0) target = $region37
  $region36: #{hotel_cancellation_forward.1} parent=0 // pred_region
    _
  $region37: #{hotel_cancellation_forward.1} parent=0 // pred_fallthru
    _

</llo_original>
